<compile_context>
chip_gen: v7x
topology: tpu7x:2x2x1
jax: 0.10.0
libtpu: 0.0.40
codegen_flags: <defaults>
</compile_context>

<pallas_src>
import jax
import jax.numpy as jnp
from jax import lax
from jax.experimental import pallas as pl
from jax.experimental.pallas import tpu as pltpu


def _encoder_kernel(x_ref, w1t_ref, b1_ref, w2t_ref, b2_ref, o_ref):
    """Fused encoder computed feature-major (batch on the lane axis).

    x_ref:   [tile_b, C]   input rows (C = class_count)
    w1t_ref: [H, C]        first linear weight, torch (out, in) layout, bf16
    b1_ref:  [H, 1]        f32
    w2t_ref: [E, H]        second linear weight, torch (out, in) layout, bf16
    b2_ref:  [E, 1]        f32
    o_ref:   [E, tile_b]   transposed output: batch on lanes -> dense, unmasked stores
    """
    x = x_ref[...].astype(jnp.bfloat16)                      # [tb, C]

    # h^T = W1 @ x^T -> [H, tb]; contraction over C (last dim of both operands, "NT" matmul).
    h = lax.dot_general(
        w1t_ref[...], x,
        dimension_numbers=(((1,), (1,)), ((), ())),
        preferred_element_type=jnp.float32)
    h = jnp.maximum(h + b1_ref[...], 0.0)                    # bias + ReLU in f32

    # y^T = W2 @ h^T -> [E, tb]
    y = jnp.dot(w2t_ref[...], h.astype(jnp.bfloat16),
                preferred_element_type=jnp.float32)
    y = y + b2_ref[...]

    # TODO(synk): EntropyNormalization guessed as per-sample average-power normalization.
    power = jnp.mean(y * y, axis=0, keepdims=True)           # per-sample (per-column) power
    o_ref[...] = (y * lax.rsqrt(power + jnp.float32(1e-8))).astype(o_ref.dtype)


def _round_up(x, m):
    return ((x + m - 1) // m) * m


def _vmem_capacity_bytes():
    try:
        return int(pltpu.get_tpu_info().vmem_capacity_bytes)
    except Exception:
        return 64 << 20  # conservative fallback: v7x per-TensorCore VMEM


def encoder_forward(x, w1, b1, w2, b2, *, max_tile_b=8192, no_grid_max_b=1024):
    """x: [B, C] f32. w1: [C, 4C], b1: [4C], w2: [4C, E], b2: [E]. Returns [B, E] f32."""
    B, C = x.shape
    H = w1.shape[1]          # 4 * class_count
    E = w2.shape[1]          # encoding_shape

    # Torch (out, in) layout + bf16 weights; biases as column vectors (feature-major).
    w1t = w1.T.astype(jnp.bfloat16)                 # [H, C]
    w2t = w2.T.astype(jnp.bfloat16)                 # [E, H]
    b1c = b1.reshape(H, 1).astype(jnp.float32)
    b2c = b2.reshape(E, 1).astype(jnp.float32)

    if B <= no_grid_max_b:
        # --- No-grid path: everything fits in VMEM; skip the pipeline machinery. ---
        vmem = pl.BlockSpec(memory_space=pltpu.MemorySpace.VMEM)
        out_t = pl.pallas_call(
            _encoder_kernel,
            out_shape=jax.ShapeDtypeStruct((E, B), jnp.float32),
            in_specs=[vmem, vmem, vmem, vmem, vmem],
            out_specs=vmem,
        )(x, w1t, b1c, w2t, b2c)
        return out_t.T

    # --- Batch-tiled path: >= 2 balanced, 128-aligned tiles; weights stay resident. ---
    num_tiles = max(2, pl.cdiv(B, max_tile_b))
    if num_tiles % 2:
        num_tiles += 1                               # even tile count -> balanced on v7x's 2 TCs
    tile_b = _round_up(pl.cdiv(B, num_tiles), 128)   # lane-aligned output tiles
    num_tiles = pl.cdiv(B, tile_b)                   # ragged last tile handled by Pallas

    # Per-step VMEM working set (x/out double-buffered; weights grid-invariant but budgeted
    # at 2x to stay honest about the default double-buffering of tiny operands).
    est = (2 * tile_b * C * 4            # x tiles (f32, double-buffered)
           + 2 * E * tile_b * 4          # out tiles (f32, double-buffered)
           + 2 * (H * C + E * H) * 2     # bf16 weights
           + 2 * (H + E) * 128 * 4       # biases (lane-padded)
           + tile_b * C * 2              # x cast to bf16
           + H * tile_b * (4 + 2)        # h (f32) + h cast to bf16
           + 2 * E * tile_b * 4)         # y and normalized y (f32)
    vmem_limit = int(min(max(2 * est, 32 << 20), _vmem_capacity_bytes()))

    out_t = pl.pallas_call(
        _encoder_kernel,
        out_shape=jax.ShapeDtypeStruct((E, B), jnp.float32),
        grid_spec=pltpu.PrefetchScalarGridSpec(
            num_scalar_prefetch=0,
            grid=(num_tiles,),
            in_specs=[
                pl.BlockSpec((tile_b, C), lambda i: (i, 0)),   # batch-tiled input
                pl.BlockSpec((H, C), lambda i: (0, 0)),        # W1^T resident
                pl.BlockSpec((H, 1), lambda i: (0, 0)),        # b1 resident
                pl.BlockSpec((E, H), lambda i: (0, 0)),        # W2^T resident
                pl.BlockSpec((E, 1), lambda i: (0, 0)),        # b2 resident
            ],
            out_specs=pl.BlockSpec((E, tile_b), lambda i: (0, i)),  # lane-dense output
        ),
        compiler_params=pltpu.CompilerParams(
            dimension_semantics=("parallel",),   # shard batch tiles over v7x's 2 TCs
            vmem_limit_bytes=vmem_limit,
        ),
    )(x, w1t, b1c, w2t, b2c)

    return out_t.T


def _init_linear(key, fan_in, fan_out):
    # Deterministic init mimicking torch.nn.Linear (uniform +/- 1/sqrt(fan_in)).
    kw, kb = jax.random.split(key)
    bound = 1.0 / jnp.sqrt(jnp.float32(fan_in))
    w = jax.random.uniform(kw, (fan_in, fan_out), jnp.float32, -bound, bound)
    b = jax.random.uniform(kb, (fan_out,), jnp.float32, -bound, bound)
    return w, b


def _reference(x, w1, b1, w2, b2):
    # Mirrors the kernel's numerics (bf16 matmul operands, f32 accumulate/elementwise).
    h = jnp.dot(x.astype(jnp.bfloat16), w1.astype(jnp.bfloat16),
                preferred_element_type=jnp.float32)
    h = jnp.maximum(h + b1, 0.0)
    y = jnp.dot(h.astype(jnp.bfloat16), w2.astype(jnp.bfloat16),
                preferred_element_type=jnp.float32)
    y = y + b2
    power = jnp.mean(y * y, axis=-1, keepdims=True)
    return y * lax.rsqrt(power + jnp.float32(1e-8))


if __name__ == "__main__":
    class_count = 16
    encoding_shape = 8

    key = jax.random.PRNGKey(0)
    kx, k1, k2, kx2 = jax.random.split(key, 4)

    w1, b1 = _init_linear(k1, class_count, 4 * class_count)
    w2, b2 = _init_linear(k2, 4 * class_count, encoding_shape)

    # Small batch: no-grid, whole-operands-in-VMEM path.
    batch = 8
    x = jax.random.normal(kx, (batch, class_count), jnp.float32)
    out_small = jax.block_until_ready(encoder_forward(x, w1, b1, w2, b2))
    ref_small = _reference(x, w1, b1, w2, b2)
    assert out_small.shape == (batch, encoding_shape)
    assert jnp.allclose(out_small, ref_small, atol=2e-3, rtol=2e-3), \
        "small-batch mismatch vs JAX reference"

    # Larger, non-tile-aligned batch: tiled path (2 balanced tiles, ragged last tile,
    # no wrapper-side padding or slicing).
    big_batch = 2000
    xb = jax.random.normal(kx2, (big_batch, class_count), jnp.float32)
    out_big = jax.block_until_ready(encoder_forward(xb, w1, b1, w2, b2))
    ref_big = _reference(xb, w1, b1, w2, b2)
    assert out_big.shape == (big_batch, encoding_shape)
    assert jnp.allclose(out_big, ref_big, atol=2e-3, rtol=2e-3), \
        "batch-tiled mismatch vs JAX reference"

    print("KERNEL_OK")
</pallas_src>

<mosaic_0001>
module attributes {stable_mosaic.version = 11 : i64} {
  func.func @_encoder_kernel(%arg0: memref<8x16xf32, #tpu.memory_space<vmem>>, %arg1: memref<64x16xbf16, #tpu.memory_space<vmem>>, %arg2: memref<64x1xf32, #tpu.memory_space<vmem>>, %arg3: memref<8x64xbf16, #tpu.memory_space<vmem>>, %arg4: memref<8x1xf32, #tpu.memory_space<vmem>>, %arg5: memref<8x8xf32, #tpu.memory_space<vmem>>) attributes {dimension_semantics = [], scalar_prefetch = 0 : i64, scratch_operands = 0 : i64, tpu.core_type = #tpu.core_type<tc>} {
    %c0 = arith.constant 0 : index
    %c0_0 = arith.constant 0 : index
    %0 = vector.load %arg0[%c0, %c0_0] : memref<8x16xf32, #tpu.memory_space<vmem>>, vector<8x16xf32>
    %1 = arith.truncf %0 : vector<8x16xf32> to vector<8x16xbf16>
    %c0_1 = arith.constant 0 : index
    %c0_2 = arith.constant 0 : index
    %2 = vector.load %arg1[%c0_1, %c0_2] : memref<64x16xbf16, #tpu.memory_space<vmem>>, vector<64x16xbf16>
    %cst = arith.constant dense<0.000000e+00> : vector<64x8xf32>
    %3 = tpu.matmul %2, %1, %cst {dimension_numbers = #tpu.dot_dimension_numbers<[1], [1], [0], [0], [0, 0, 1, 0], [], []>} : vector<64x16xbf16>, vector<8x16xbf16>, vector<64x8xf32> -> vector<64x8xf32>
    %c0_3 = arith.constant 0 : index
    %c0_4 = arith.constant 0 : index
    %4 = vector.load %arg2[%c0_3, %c0_4] : memref<64x1xf32, #tpu.memory_space<vmem>>, vector<64x1xf32>
    %5 = vector.broadcast %4 : vector<64x1xf32> to vector<64x8xf32>
    %6 = arith.addf %3, %5 : vector<64x8xf32>
    %cst_5 = arith.constant 0.000000e+00 : f32
    %7 = vector.broadcast %cst_5 : f32 to vector<64x8xf32>
    %8 = arith.maximumf %6, %7 : vector<64x8xf32>
    %c0_6 = arith.constant 0 : index
    %c0_7 = arith.constant 0 : index
    %9 = vector.load %arg3[%c0_6, %c0_7] : memref<8x64xbf16, #tpu.memory_space<vmem>>, vector<8x64xbf16>
    %10 = arith.truncf %8 : vector<64x8xf32> to vector<64x8xbf16>
    %cst_8 = arith.constant dense<0.000000e+00> : vector<8x8xf32>
    %11 = tpu.matmul %9, %10, %cst_8 {dimension_numbers = #tpu.dot_dimension_numbers<[1], [0], [0], [1], [0, 0, 1, 1], [], []>} : vector<8x64xbf16>, vector<64x8xbf16>, vector<8x8xf32> -> vector<8x8xf32>
    %c0_9 = arith.constant 0 : index
    %c0_10 = arith.constant 0 : index
    %12 = vector.load %arg4[%c0_9, %c0_10] : memref<8x1xf32, #tpu.memory_space<vmem>>, vector<8x1xf32>
    %13 = vector.broadcast %12 : vector<8x1xf32> to vector<8x8xf32>
    %14 = arith.addf %11, %13 : vector<8x8xf32>
    %15 = arith.mulf %14, %14 : vector<8x8xf32>
    %cst_11 = arith.constant dense<0.000000e+00> : vector<8xf32>
    %16 = vector.multi_reduction <add>, %15, %cst_11 [0] : vector<8x8xf32> to vector<8xf32>
    %17 = vector.shape_cast %16 : vector<8xf32> to vector<1x8xf32>
    %cst_12 = arith.constant 8.000000e+00 : f32
    %18 = vector.broadcast %cst_12 : f32 to vector<1x8xf32>
    %19 = arith.divf %17, %18 : vector<1x8xf32>
    %cst_13 = arith.constant 9.99999993E-9 : f32
    %20 = vector.broadcast %cst_13 : f32 to vector<1x8xf32>
    %21 = arith.addf %19, %20 : vector<1x8xf32>
    %22 = math.rsqrt %21 : vector<1x8xf32>
    %23 = vector.broadcast %22 : vector<1x8xf32> to vector<8x8xf32>
    %24 = arith.mulf %14, %23 : vector<8x8xf32>
    %c0_14 = arith.constant 0 : index
    %c0_15 = arith.constant 0 : index
    %25 = vector.load %arg5[%c0_14, %c0_15] : memref<8x8xf32, #tpu.memory_space<vmem>>, vector<8x8xf32>
    tpu.vector_store %arg5[%c0_14, %c0_15], %24 {strides = array<i32>} : memref<8x8xf32, #tpu.memory_space<vmem>>, vector<8x8xf32>,
    return
  }
}

</mosaic_0001>

<llo_original>
// kernel: tpu_custom_call.1
$region0: #{tpu_custom_call.1}
  #allocation0 [shape = 'u32[]', space=smem, size = 0x4, offset = 0x4, fixed_abs, tag = 'smem constant byte address 0x4 - core index']
  #allocation1 [shape = 'u32[144,128]{1,0:T(1,128)}', space=vmem, size = 0x12000, scoped, tag = 'internal scratch']
  %s0 = inlined_call_operand.vmem [shape: f32[8,16], index: 0, kind: input, shape index: {}]
  %s1 = inlined_call_operand.vmem [shape: bf16[64,16], index: 1, kind: input, shape index: {}]
  %s2 = inlined_call_operand.vmem [shape: f32[64,1], index: 2, kind: input, shape index: {}]
  %s3 = inlined_call_operand.vmem [shape: bf16[8,64], index: 3, kind: input, shape index: {}]
  %s4 = inlined_call_operand.vmem [shape: f32[8,1], index: 4, kind: input, shape index: {}]
  %s5 = inlined_call_operand.hbm [shape: f32[8,8], index: 5, kind: output, shape index: {}]
  %s6 = sld [smem:[#allocation0]]
  $region30: #{tpu_custom_call.1} parent=0
    _
  %s8 = ssub.s32 1, %s6
  %s9 = scalar_select 0, %s8, %s6
  $region1: #{tpu_custom_call.1} parent=0
    #allocation2 [shape = 'u8[4096]{0}', space=vmem, size = 0x1000, scoped, tag = 'output window, operand 0, single buffered']
    #allocation3 [shape = 's32[1]{0}', space=sflag, size = 0x4, scoped, tag = 'scoped memory for tpu_custom_call.1']
    %10 = vsyncpa [#allocation3], 0
    // Predicated region
    $region2: #{tpu_custom_call.1} parent=1 // pred_check
      _
    $region3: #{tpu_custom_call.1} parent=1 // pred_check_branch
      %12 = sbr.rel (0) target = $region5
    $region4: #{tpu_custom_call.1} parent=1 // pred_region
      _
    $region5: #{tpu_custom_call.1} parent=1 // pred_fallthru
      _
    // Predicated region
    $region6: #{tpu_custom_call.1} parent=1 // pred_check
      _
    $region7: #{tpu_custom_call.1} parent=1 // pred_check_branch
      %14 = sbr.rel (0) target = $region9
    $region8: #{tpu_custom_call.1} parent=1 // pred_region
      _
    $region9: #{tpu_custom_call.1} parent=1 // pred_fallthru
      _
    // Predicated region
    $region10: #{tpu_custom_call.1} parent=1 // pred_check
      _
    $region11: #{tpu_custom_call.1} parent=1 // pred_check_branch
      %16 = sbr.rel (0) target = $region13
    $region12: #{tpu_custom_call.1} parent=1 // pred_region
      _
    $region13: #{tpu_custom_call.1} parent=1 // pred_fallthru
      _
    // Predicated region
    $region14: #{tpu_custom_call.1} parent=1 // pred_check
      _
    $region15: #{tpu_custom_call.1} parent=1 // pred_check_branch
      %18 = sbr.rel (0) target = $region17
    $region16: #{tpu_custom_call.1} parent=1 // pred_region
      _
    $region17: #{tpu_custom_call.1} parent=1 // pred_fallthru
      _
    // Predicated region
    $region18: #{tpu_custom_call.1} parent=1 // pred_check
      _
    $region19: #{tpu_custom_call.1} parent=1 // pred_check_branch
      %20 = sbr.rel (0) target = $region21
    $region20: #{tpu_custom_call.1} parent=1 // pred_region
      _
    $region21: #{tpu_custom_call.1} parent=1 // pred_fallthru
      _
    %v22 = vld [vmem:[%s0] sm:$0xff]
    %v23 = vpack.c.bf16 %v22, %v22
    %v24 = vld [vmem:[%s1] sm:$0xf]
    %v25 = vld [vmem:[%s1 + $0x4] sm:$0xf]
    %v26 = vld [vmem:[%s1 + $0x8] sm:$0xf]
    %v27 = vld [vmem:[%s1 + $0xc] sm:$0xf]
    %v28 = vld [vmem:[%s1 + $0x10] sm:$0xf]
    %v29 = vld [vmem:[%s1 + $0x14] sm:$0xf]
    %v30 = vld [vmem:[%s1 + $0x18] sm:$0xf]
    %v31 = vld [vmem:[%s1 + $0x1c] sm:$0xf]
    %v32 = vld [vmem:[%s2] sm:$0xff]
    %v33 = vld [vmem:[%s2 + $0x8] sm:$0xff]
    %v34 = vld [vmem:[%s2 + $0x10] sm:$0xff]
    %v35 = vld [vmem:[%s2 + $0x18] sm:$0xff]
    %v36 = vld [vmem:[%s2 + $0x20] sm:$0xff]
    %v37 = vld [vmem:[%s2 + $0x28] sm:$0xff]
    %v38 = vld [vmem:[%s2 + $0x30] sm:$0xff]
    %v39 = vld [vmem:[%s2 + $0x38] sm:$0xff]
    %41 = vset.pattern.permute.xlu0 0
    %42 = vperm.xlu0 %41, %v32
    %v43 = vpop.permute.xlu0 %42
    %46 = vset.pattern.permute.xlu0 0
    %47 = vperm.xlu0 %46, %v33
    %v48 = vpop.permute.xlu0 %47
    %51 = vset.pattern.permute.xlu0 0
    %52 = vperm.xlu0 %51, %v34
    %v53 = vpop.permute.xlu0 %52
    %56 = vset.pattern.permute.xlu0 0
    %57 = vperm.xlu0 %56, %v35
    %v58 = vpop.permute.xlu0 %57
    %61 = vset.pattern.permute.xlu0 0
    %62 = vperm.xlu0 %61, %v36
    %v63 = vpop.permute.xlu0 %62
    %66 = vset.pattern.permute.xlu0 0
    %67 = vperm.xlu0 %66, %v37
    %v68 = vpop.permute.xlu0 %67
    %71 = vset.pattern.permute.xlu0 0
    %72 = vperm.xlu0 %71, %v38
    %v73 = vpop.permute.xlu0 %72
    %76 = vset.pattern.permute.xlu0 0
    %77 = vperm.xlu0 %76, %v39
    %v78 = vpop.permute.xlu0 %77
    %v88 = vunpack.c.l.b16 %v24
    %v89 = vunpack.c.l.b16 %v25
    %v90 = vunpack.c.l.b16 %v26
    %v91 = vunpack.c.l.b16 %v27
    %v92 = vunpack.c.l.b16 %v28
    %v93 = vunpack.c.l.b16 %v29
    %v94 = vunpack.c.l.b16 %v30
    %v95 = vunpack.c.l.b16 %v31
    %v96 = vpack.c.b16 %v89, %v88
    %v97 = vpack.c.b16 %v91, %v90
    %v98 = vpack.c.b16 %v93, %v92
    %v99 = vpack.c.b16 %v95, %v94
    %vm100 = vcmask 130048
    %v102 = vsel %vm100, %v96, 0
    %v105 = vsel %vm100, %v97, 0
    %v108 = vsel %vm100, %v98, 0
    %v111 = vsel %vm100, %v99, 0
    %v114 = vsel %vm100, %v23, 0
    %116 = vmatprep.subr.bf16.mxu0 0
    %117 = vmatpush1.bf16.xpose.msra.mxu0 %v114
    %118 = vmatprep.subr.bf16.mxu0 0
    %119 = vmatpush1.bf16.xpose.msra.mxu0 0
    %120 = vmatprep.subr.bf16.mxu0 0
    %121 = vmatpush1.bf16.xpose.msra.mxu0 0
    %122 = vmatprep.subr.bf16.mxu0 0
    %123 = vmatpush1.bf16.xpose.msra.mxu0 0
    %124 = vmatprep.subr.bf16.mxu0 0
    %125 = vmatpush1.bf16.xpose.msra.mxu0 0
    %126 = vmatprep.subr.bf16.mxu0 0
    %127 = vmatpush1.bf16.xpose.msra.mxu0 0
    %128 = vmatprep.subr.bf16.mxu0 0
    %129 = vmatpush1.bf16.xpose.msra.mxu0 0
    %130 = vmatprep.subr.bf16.mxu0 0
    %131 = vmatpush1.bf16.xpose.msra.mxu0 0
    %132 = vmatprep.subr.bf16.mxu0 0
    %133 = vmatpush1.bf16.xpose.msra.mxu0 0
    %134 = vmatprep.subr.bf16.mxu0 0
    %135 = vmatpush1.bf16.xpose.msra.mxu0 0
    %136 = vmatprep.subr.bf16.mxu0 0
    %137 = vmatpush1.bf16.xpose.msra.mxu0 0
    %138 = vmatprep.subr.bf16.mxu0 0
    %139 = vmatpush1.bf16.xpose.msra.mxu0 0
    %140 = vmatprep.subr.bf16.mxu0 0
    %141 = vmatpush1.bf16.xpose.msra.mxu0 0
    %142 = vmatprep.subr.bf16.mxu0 0
    %143 = vmatpush1.bf16.xpose.msra.mxu0 0
    %144 = vmatprep.subr.bf16.mxu0 0
    %145 = vmatpush1.bf16.xpose.msra.mxu0 0
    %146 = vmatprep.subr.bf16.mxu0 0
    %147 = vmatpush1.bf16.xpose.msra.mxu0 0
    %148 = vmatprep.mubr.bf16.mxu0 0
    %149 = vmatmul.mubr.bf16.gmra.mrb[0].mxu0 %v102
    %v150 = vpop.f32.mrb[0].mxu0
    %v151 = vadd.f32 %v43, %v150
    %v152 = vpop.f32.mrb[0].mxu0
    %v153 = vpop.f32.mrb[0].mxu0
    %v154 = vadd.f32 %v48, %v153
    %v155 = vpop.f32.mrb[0].mxu0
    %156 = vmatprep.mubr.bf16.mxu0 0
    %157 = vmatmul.mubr.bf16.gmra.mrb[0].mxu0 %v105
    %v158 = vpop.f32.mrb[0].mxu0
    %v159 = vadd.f32 %v53, %v158
    %v160 = vpop.f32.mrb[0].mxu0
    %v161 = vpop.f32.mrb[0].mxu0
    %v162 = vadd.f32 %v58, %v161
    %v163 = vpop.f32.mrb[0].mxu0
    %164 = vmatprep.mubr.bf16.mxu0 0
    %165 = vmatmul.mubr.bf16.gmra.mrb[0].mxu0 %v108
    %v166 = vpop.f32.mrb[0].mxu0
    %v167 = vadd.f32 %v63, %v166
    %v168 = vpop.f32.mrb[0].mxu0
    %v169 = vpop.f32.mrb[0].mxu0
    %v170 = vadd.f32 %v68, %v169
    %v171 = vpop.f32.mrb[0].mxu0
    %172 = vmatprep.mubr.bf16.mxu0 0
    %173 = vmatmul.mubr.bf16.gmra.mrb[0].mxu0 %v111
    %v174 = vpop.f32.mrb[0].mxu0
    %v175 = vadd.f32 %v73, %v174
    %v176 = vpop.f32.mrb[0].mxu0
    %v177 = vpop.f32.mrb[0].mxu0
    %v178 = vadd.f32 %v78, %v177
    %v179 = vpop.f32.mrb[0].mxu0
    %180 = vdwg.mxu0
    %v181 = vmax.f32 %v151, 0.0
    %v182 = vmax.f32 %v154, 0.0
    %v183 = vmax.f32 %v159, 0.0
    %v184 = vmax.f32 %v162, 0.0
    %v185 = vmax.f32 %v167, 0.0
    %v186 = vmax.f32 %v170, 0.0
    %v187 = vmax.f32 %v175, 0.0
    %v188 = vmax.f32 %v178, 0.0
    %v189 = vld [vmem:[%s3] sm:$0xf]
    %v190 = vpack.c.bf16 %v182, %v181
    %v191 = vpack.c.bf16 %v184, %v183
    %v192 = vpack.c.bf16 %v186, %v185
    %v193 = vpack.c.bf16 %v188, %v187
    %v194 = vld [vmem:[%s4] sm:$0xff]
    %196 = vset.pattern.permute.xlu0 0
    %197 = vperm.xlu0 %196, %v194
    %v198 = vpop.permute.xlu0 %197
    %vm200 = vcmask 523264
    %v202 = vsel %vm200, %v189, 0
    %204 = vmatprep.subr.bf16.mxu0 0
    %205 = vmatpush1.bf16.msra.mxu0 %v190
    %206 = vmatprep.subr.bf16.mxu0 0
    %207 = vmatpush1.bf16.msra.mxu0 %v191
    %208 = vmatprep.subr.bf16.mxu0 0
    %209 = vmatpush1.bf16.msra.mxu0 %v192
    %210 = vmatprep.subr.bf16.mxu0 0
    %211 = vmatpush1.bf16.msra.mxu0 %v193
    %212 = vmatprep.subr.bf16.mxu0 0
    %213 = vmatpush1.bf16.msra.mxu0 0
    %214 = vmatprep.subr.bf16.mxu0 0
    %215 = vmatpush1.bf16.msra.mxu0 0
    %216 = vmatprep.subr.bf16.mxu0 0
    %217 = vmatpush1.bf16.msra.mxu0 0
    %218 = vmatprep.subr.bf16.mxu0 0
    %219 = vmatpush1.bf16.msra.mxu0 0
    %220 = vmatprep.subr.bf16.mxu0 0
    %221 = vmatpush1.bf16.msra.mxu0 0
    %222 = vmatprep.subr.bf16.mxu0 0
    %223 = vmatpush1.bf16.msra.mxu0 0
    %224 = vmatprep.subr.bf16.mxu0 0
    %225 = vmatpush1.bf16.msra.mxu0 0
    %226 = vmatprep.subr.bf16.mxu0 0
    %227 = vmatpush1.bf16.msra.mxu0 0
    %228 = vmatprep.subr.bf16.mxu0 0
    %229 = vmatpush1.bf16.msra.mxu0 0
    %230 = vmatprep.subr.bf16.mxu0 0
    %231 = vmatpush1.bf16.msra.mxu0 0
    %232 = vmatprep.subr.bf16.mxu0 0
    %233 = vmatpush1.bf16.msra.mxu0 0
    %234 = vmatprep.subr.bf16.mxu0 0
    %235 = vmatpush1.bf16.msra.mxu0 0
    %236 = vmatprep.mubr.bf16.mxu0 0
    %237 = vmatmul.mubr.bf16.gmra.mrb[0].mxu0 %v202
    %v238 = vpop.f32.mrb[0].mxu0
    %v239 = vadd.f32 %v198, %v238
    %v240 = vpop.f32.mrb[0].mxu0
    %v241 = vpop.f32.mrb[0].mxu0
    %v242 = vpop.f32.mrb[0].mxu0
    %243 = vdwg.mxu0
    %v244 = vmul.f32 %v239, %v239
    %vm245 = vcmask 64512
    %v246 = vsel %vm245, %v244, 0.0
    %v247 = vrot.slane %v246, 4
    %v248 = vadd.f32 %v246, %v247
    %v249 = vrot.slane %v248, 2
    %v250 = vadd.f32 %v248, %v249
    %v251 = vrot.slane %v250, 1
    %v252 = vadd.f32 %v250, %v251
    %v253 = vrcp.pop 8.0
    %v254 = vmul.f32 %v252, %v253
    %v255 = vadd.f32 %v254, 1e-08
    %v256 = vrsqrt.pop %v255
    %v257 = vmul.f32 %v239, %v256
    %258 = vst.msk [vmem:[#allocation2] sm:$0xff] %vm245, %v257
    // Predicated region
    $region22: #{tpu_custom_call.1} parent=1 // pred_check
      _
    $region23: #{tpu_custom_call.1} parent=1 // pred_check_branch
      %260 = sbr.rel (0) target = $region25
    $region24: #{tpu_custom_call.1} parent=1 // pred_region
      %s262 = ssub.s32 128, 128
      %263 = vsyncadd [#allocation3], %s262
      %s265 = sshll.u32 [#allocation2], 4
      %s266 = int_to_ptr.vmem [resolvable:$true] %s265
      %268 = dma.vmem_to_hbm [thread:$0]  %s266, 128, %s5, [#allocation3]
    $region25: #{tpu_custom_call.1} parent=1 // pred_fallthru
      _
    // Predicated region
    $region26: #{tpu_custom_call.1} parent=1 // pred_check
      _
    $region27: #{tpu_custom_call.1} parent=1 // pred_check_branch
      %270 = sbr.rel (0) target = $region29
    $region28: #{tpu_custom_call.1} parent=1 // pred_region
      %271 = dma.done [#allocation3], 128
    $region29: #{tpu_custom_call.1} parent=1 // pred_fallthru
      _
    %272 = vsyncpa [#allocation3], 1

</llo_original>
